<compile_context>
chip_gen: v5e
topology: v5e:2x2
jax: 0.10.0
libtpu: 0.0.40
codegen_flags: <defaults>
</compile_context>

<pallas_src>
import math
import functools

import numpy as np
import jax
import jax.numpy as jnp
from jax import lax
from jax.experimental import pallas as pl
from jax.experimental.pallas import tpu as pltpu


def _round_up(x, m):
    return ((x + m - 1) // m) * m


def _prompt_embedding_kernel(tok_ref, rhs_ref, o_ref, *, vocab, groups):
    # tok_ref: (R, G)        int32 token ids, G consecutive tokens per row
    # rhs_ref: (G*V, G*D)    kron(I_G, sqrt(D)*table), VMEM-resident across grid
    # o_ref:   (R, G*D)      packed scaled embeddings (lane-dense store)
    tok = tok_ref[...]                                        # (R, G)
    r = tok.shape[0]
    gv = groups * vocab
    cols = lax.broadcasted_iota(jnp.int32, (r, gv), 1)        # column ids 0..G*V-1

    # Build the packed one-hot without any reshape / cross-lane relayout:
    # row r has a 1 at column g*V + tok[r, g] for each g (ranges are disjoint).
    hit = None
    for g in range(groups):                                    # G is small & static
        t = tok[:, g:g + 1] + g * vocab                        # (R, 1)
        m = cols == t
        hit = m if hit is None else (hit | m)

    # Native-dtype matmul (exact 0/1 gather), f32 accumulation on the MXU.
    onehot = hit.astype(rhs_ref.dtype)                         # (R, G*V)
    gathered = jnp.dot(onehot, rhs_ref[...],
                       preferred_element_type=jnp.float32)     # (R, G*D)
    o_ref[...] = gathered.astype(o_ref.dtype)


def _choose_block_rows(rows, g, v, d, table_bytes, out_bytes, vmem_budget):
    """Pick packed-row tile size R from a VMEM budget (double-buffered I/O)."""
    rhs_bytes = (g * v) * (g * d) * table_bytes                # resident RHS
    per_row = (2 * g * d * out_bytes                           # output, 2 buffers
               + 2 * 128 * 4                                   # lane-padded int32 tokens, 2 buffers
               + g * v * table_bytes)                          # one-hot working set
    avail = max(vmem_budget - rhs_bytes, per_row * 8)
    r = max(8, avail // per_row)
    r = min(r, 2048)                                           # sane upper bound
    if rows > 8:                                               # >=2 grid steps -> 2 TCs on v7x
        r = min(r, _round_up(pl.cdiv(rows, 2), 8))
    r = min(r, _round_up(max(rows, 1), 8))
    return max(8, _round_up(int(r), 8))


def prompt_embedding_forward(tokens, embedding_table, *,
                             vmem_budget_bytes=24 * 1024 * 1024):
    """PromptEmbedding.forward: sqrt(embed_dim) * embedding_table[tokens]."""
    v, d = embedding_table.shape
    scale = math.sqrt(d)
    out_dtype = embedding_table.dtype
    table_bytes = jnp.dtype(embedding_table.dtype).itemsize
    out_bytes = jnp.dtype(out_dtype).itemsize

    # Fold sqrt(D) into the tiny table once (exact for the 0/1 gather).
    table_scaled = (embedding_table.astype(jnp.float32) * scale).astype(
        embedding_table.dtype)

    # Lane packing: G consecutive tokens per output row so the stored block's
    # lane width is G*D (>= 128 when D < 128).
    g = max(1, 128 // d) if d < 128 else 1
    rhs = table_scaled if g == 1 else jnp.kron(
        jnp.eye(g, dtype=table_scaled.dtype), table_scaled)    # (G*V, G*D)

    orig_shape = tokens.shape
    flat = tokens.reshape(-1).astype(jnp.int32)
    t = flat.shape[0]

    rows = pl.cdiv(t, g)
    r_blk = _choose_block_rows(rows, g, v, d, table_bytes, out_bytes,
                               vmem_budget_bytes)
    rows_pad = r_blk * pl.cdiv(rows, r_blk)
    t_pad = rows_pad * g
    if t_pad != t:
        flat = jnp.pad(flat, (0, t_pad - t))                   # pad id 0; sliced off below
    tok2d = flat.reshape(rows_pad, g)                          # lane-dense token slab

    kernel = functools.partial(_prompt_embedding_kernel, vocab=v, groups=g)

    out = pl.pallas_call(
        kernel,
        out_shape=jax.ShapeDtypeStruct((rows_pad, g * d), out_dtype),
        grid_spec=pl.GridSpec(
            grid=(rows_pad // r_blk,),
            in_specs=[
                pl.BlockSpec((r_blk, g), lambda i: (i, 0)),        # token rows
                pl.BlockSpec((g * v, g * d), lambda i: (0, 0)),    # resident RHS
            ],
            out_specs=pl.BlockSpec((r_blk, g * d), lambda i: (i, 0)),
        ),
        compiler_params=pltpu.CompilerParams(
            dimension_semantics=("parallel",),        # token axis shards across TCs
            vmem_limit_bytes=32 * 1024 * 1024,        # above v5e's 16 MiB default, within v7x physical
        ),
    )(tok2d, rhs)

    # Un-pack: row r holds tokens r*G .. r*G+G-1 contiguously -> free reshape.
    out = out.reshape(t_pad, d)[:t]
    return out.reshape(*orig_shape, d)


def _reference_forward(tokens, embedding_table):
    """Pure-JAX reference mirroring the PyTorch module."""
    d = embedding_table.shape[1]
    return math.sqrt(d) * jnp.take(embedding_table, tokens, axis=0)


if __name__ == "__main__":
    # Small shapes consistent with the module: a small "direction" vocabulary
    # and a modest embed dim; tokens shaped (batch, seq).
    direction_size = 16
    embed_dim = 32
    B, S = 2, 8

    key = jax.random.PRNGKey(0)
    k_tab, k_tok = jax.random.split(key)
    table = jax.random.normal(k_tab, (direction_size, embed_dim), dtype=jnp.float32)
    tokens = jax.random.randint(k_tok, (B, S), 0, direction_size, dtype=jnp.int32)

    out = prompt_embedding_forward(tokens, table)
    out = jax.block_until_ready(out)

    ref = _reference_forward(tokens, table)
    np.testing.assert_allclose(np.asarray(out), np.asarray(ref), rtol=1e-5, atol=1e-5)

    print("KERNEL_OK")
</pallas_src>

<mosaic_0001>
module attributes {stable_mosaic.version = 11 : i64} {
  func.func @_prompt_embedding_kernel(%arg0: i32, %arg1: memref<8x4xi32, #tpu.memory_space<vmem>>, %arg2: memref<64x128xf32, #tpu.memory_space<vmem>>, %arg3: memref<8x128xf32, #tpu.memory_space<vmem>>) attributes {dimension_semantics = [#tpu.dimension_semantics<parallel>], iteration_bounds = array<i64: 1>, scalar_prefetch = 0 : i64, scratch_operands = 0 : i64, tpu.core_type = #tpu.core_type<tc>, window_params = [{transform_indices = @transform_0, window_bounds = array<i64: 8, 4>}, {pipeline_mode = #tpu.pipeline_mode<synchronous>, transform_indices = @transform_1, window_bounds = array<i64: 64, 128>}, {transform_indices = @transform_2, window_bounds = array<i64: 8, 128>}]} {
    %c0 = arith.constant 0 : index
    %c0_0 = arith.constant 0 : index
    %0 = vector.load %arg1[%c0, %c0_0] : memref<8x4xi32, #tpu.memory_space<vmem>>, vector<8x4xi32>
    %1 = tpu.iota {dimensions = array<i32: 1>} : vector<8x64xi32>
    %2 = vector.extract_strided_slice %0 {offsets = [0, 0], sizes = [8, 1], strides = [1, 1]} : vector<8x4xi32> to vector<8x1xi32>
    %c0_i32 = arith.constant 0 : i32
    %3 = vector.broadcast %c0_i32 : i32 to vector<8x1xi32>
    %4 = arith.addi %2, %3 : vector<8x1xi32>
    %5 = vector.broadcast %4 : vector<8x1xi32> to vector<8x64xi32>
    %6 = arith.cmpi eq, %1, %5 : vector<8x64xi32>
    %7 = vector.extract_strided_slice %0 {offsets = [0, 1], sizes = [8, 1], strides = [1, 1]} : vector<8x4xi32> to vector<8x1xi32>
    %c16_i32 = arith.constant 16 : i32
    %8 = vector.broadcast %c16_i32 : i32 to vector<8x1xi32>
    %9 = arith.addi %7, %8 : vector<8x1xi32>
    %10 = vector.broadcast %9 : vector<8x1xi32> to vector<8x64xi32>
    %11 = arith.cmpi eq, %1, %10 : vector<8x64xi32>
    %12 = arith.ori %6, %11 : vector<8x64xi1>
    %13 = vector.extract_strided_slice %0 {offsets = [0, 2], sizes = [8, 1], strides = [1, 1]} : vector<8x4xi32> to vector<8x1xi32>
    %c32_i32 = arith.constant 32 : i32
    %14 = vector.broadcast %c32_i32 : i32 to vector<8x1xi32>
    %15 = arith.addi %13, %14 : vector<8x1xi32>
    %16 = vector.broadcast %15 : vector<8x1xi32> to vector<8x64xi32>
    %17 = arith.cmpi eq, %1, %16 : vector<8x64xi32>
    %18 = arith.ori %12, %17 : vector<8x64xi1>
    %19 = vector.extract_strided_slice %0 {offsets = [0, 3], sizes = [8, 1], strides = [1, 1]} : vector<8x4xi32> to vector<8x1xi32>
    %c48_i32 = arith.constant 48 : i32
    %20 = vector.broadcast %c48_i32 : i32 to vector<8x1xi32>
    %21 = arith.addi %19, %20 : vector<8x1xi32>
    %22 = vector.broadcast %21 : vector<8x1xi32> to vector<8x64xi32>
    %23 = arith.cmpi eq, %1, %22 : vector<8x64xi32>
    %24 = arith.ori %18, %23 : vector<8x64xi1>
    %25 = arith.extui %24 : vector<8x64xi1> to vector<8x64xi32>
    %26 = arith.sitofp %25 : vector<8x64xi32> to vector<8x64xf32>
    %c0_1 = arith.constant 0 : index
    %c0_2 = arith.constant 0 : index
    %27 = vector.load %arg2[%c0_1, %c0_2] : memref<64x128xf32, #tpu.memory_space<vmem>>, vector<64x128xf32>
    %cst = arith.constant dense<0.000000e+00> : vector<8x128xf32>
    %28 = tpu.matmul %26, %27, %cst {dimension_numbers = #tpu.dot_dimension_numbers<[1], [0], [0], [1], [0, 0, 1, 1], [], []>} : vector<8x64xf32>, vector<64x128xf32>, vector<8x128xf32> -> vector<8x128xf32>
    %c0_3 = arith.constant 0 : index
    %c0_4 = arith.constant 0 : index
    %29 = vector.load %arg3[%c0_3, %c0_4] : memref<8x128xf32, #tpu.memory_space<vmem>>, vector<8x128xf32>
    tpu.vector_store %arg3[%c0_3, %c0_4], %28 {strides = array<i32>} : memref<8x128xf32, #tpu.memory_space<vmem>>, vector<8x128xf32>,
    return
  }
  func.func @transform_0(%arg0: i32) -> (i32, i32) {
    %c0_i32 = arith.constant 0 : i32
    %c0_i32_0 = arith.constant 0 : i32
    return %arg0, %c0_i32 : i32, i32
  }
  func.func @transform_1(%arg0: i32) -> (i32, i32) {
    %c0_i32 = arith.constant 0 : i32
    %c0_i32_0 = arith.constant 0 : i32
    %c0_i32_1 = arith.constant 0 : i32
    return %c0_i32, %c0_i32_0 : i32, i32
  }
  func.func @transform_2(%arg0: i32) -> (i32, i32) {
    %c0_i32 = arith.constant 0 : i32
    %c0_i32_0 = arith.constant 0 : i32
    return %arg0, %c0_i32 : i32, i32
  }
}

</mosaic_0001>

<llo_original>
// kernel: tpu_custom_call.1
$region0: #{tpu_custom_call.1}
  #allocation0 [shape = 'u32[]', space=smem, size = 0x4, offset = 0x4, fixed_abs, tag = 'smem constant byte address 0x4 - core index']
  #allocation1 [shape = 'u32[72,128]{1,0:T(1,128)}', space=vmem, size = 0x9000, scoped, tag = 'internal scratch']
  %s0 = inlined_call_operand.vmem [shape: s32[8,4], index: 0, kind: input, shape index: {}]
  %s1 = inlined_call_operand.hbm [shape: f32[64,128], index: 1, kind: input, shape index: {}]
  %s2 = inlined_call_operand.hbm [shape: f32[8,128], index: 2, kind: output, shape index: {}]
  %s3 = sld [smem:[#allocation0]]
  $region22: #{tpu_custom_call.1} parent=0
    _
  %s5 = ssub.s32 1, %s3
  %s6 = scalar_select 0, %s5, %s3
  $region1: #{tpu_custom_call.1} parent=0
    #allocation2 [shape = 'u8[32768]{0}', space=vmem, size = 0x8000, scoped, tag = 'input window, operand 1, single buffered']
    #allocation3 [shape = 's32[1]{0}', space=sflag, size = 0x4, scoped, tag = 'scoped memory for tpu_custom_call.1']
    #allocation4 [shape = 's32[1]{0}', space=sflag, size = 0x4, scoped, tag = 'scoped memory for tpu_custom_call.1']
    #allocation5 [shape = 'u8[4096]{0}', space=vmem, size = 0x1000, scoped, tag = 'output window, operand 0, single buffered']
    %7 = vsyncpa [#allocation3], 0
    %8 = vsyncpa [#allocation4], 0
    // Predicated region
    $region2: #{tpu_custom_call.1} parent=1 // pred_check
      _
    $region3: #{tpu_custom_call.1} parent=1 // pred_check_branch
      %10 = sbr.rel (0) target = $region5
    $region4: #{tpu_custom_call.1} parent=1 // pred_region
      _
    $region5: #{tpu_custom_call.1} parent=1 // pred_fallthru
      _
    // Predicated region
    $region6: #{tpu_custom_call.1} parent=1 // pred_check
      _
    $region7: #{tpu_custom_call.1} parent=1 // pred_check_branch
      %12 = sbr.rel (0) target = $region9
    $region8: #{tpu_custom_call.1} parent=1 // pred_region
      %14 = vsyncadd [#allocation3], 0
      %s15 = sshll.u32 %s1, 4
      %s16 = int_to_ptr.hbm [resolvable:$true] %s15
      %s17 = sshll.u32 [#allocation2], 4
      %s18 = int_to_ptr.vmem [resolvable:$true] %s17
      %23 = dma.hbm_to_vmem [thread:$0]  %s16, 1024, %s18, [#allocation3], 128, 128, 8
    $region9: #{tpu_custom_call.1} parent=1 // pred_fallthru
      _
    // Predicated region
    $region10: #{tpu_custom_call.1} parent=1 // pred_check
      _
    $region11: #{tpu_custom_call.1} parent=1 // pred_check_branch
      %25 = sbr.rel (0) target = $region13
    $region12: #{tpu_custom_call.1} parent=1 // pred_region
      %27 = dma.done [#allocation3], 1024
    $region13: #{tpu_custom_call.1} parent=1 // pred_fallthru
      _
    %v28 = vld [vmem:[%s0] sm:$0xff]
    %v29 = vlaneseq
    %v30 = vand.u32 %v29, 127
    %31 = vset.pattern.permute.xlu0 0
    %32 = vperm.xlu0 %31, %v28
    %v33 = vpop.permute.xlu0 %32
    %vm34 = vcmp.eq.s32.totalorder %v30, %v33
    %v35 = vadd.s32 %v28, 16
    %36 = vset.pattern.permute.xlu0 1
    %37 = vperm.xlu0 %36, %v35
    %v38 = vpop.permute.xlu0 %37
    %vm39 = vcmp.eq.s32.totalorder %v30, %v38
    %vm40 = vmor %vm34, %vm39
    %v41 = vadd.s32 %v28, 32
    %42 = vset.pattern.permute.xlu0 2
    %43 = vperm.xlu0 %42, %v41
    %v44 = vpop.permute.xlu0 %43
    %vm45 = vcmp.eq.s32.totalorder %v30, %v44
    %vm46 = vmor %vm40, %vm45
    %v47 = vadd.s32 %v28, 48
    %48 = vset.pattern.permute.xlu0 3
    %49 = vperm.xlu0 %48, %v47
    %v50 = vpop.permute.xlu0 %49
    %vm51 = vcmp.eq.s32.totalorder %v30, %v50
    %vm52 = vmor %vm46, %vm51
    %v53 = vsel %vm52, 1, 0
    %v54 = vcvt.s32.f32 %v53
    %v55 = vld [vmem:[#allocation2] sm:$0xff]
    %v56 = vld [vmem:[#allocation2 + $0x8] sm:$0xff]
    %v57 = vld [vmem:[#allocation2 + $0x10] sm:$0xff]
    %v58 = vld [vmem:[#allocation2 + $0x18] sm:$0xff]
    %v59 = vld [vmem:[#allocation2 + $0x20] sm:$0xff]
    %v60 = vld [vmem:[#allocation2 + $0x28] sm:$0xff]
    %v61 = vld [vmem:[#allocation2 + $0x30] sm:$0xff]
    %v62 = vld [vmem:[#allocation2 + $0x38] sm:$0xff]
    %vm63 = vcmask 523264
    %v65 = vsel %vm63, %v54, 0
    %67 = vmatpush.msra.mxu0 0.0
    %68 = vmatpush.msra.mxu0 0.0
    %69 = vmatpush.msra.mxu0 0.0
    %70 = vmatpush.msra.mxu0 0.0
    %71 = vmatpush.msra.mxu0 0.0
    %72 = vmatpush.msra.mxu0 0.0
    %73 = vmatpush.msra.mxu0 0.0
    %74 = vmatpush.msra.mxu0 0.0
    %75 = vmatpush.msra.mxu0 %v62
    %76 = vmatpush.msra.mxu0 %v61
    %77 = vmatpush.msra.mxu0 %v60
    %78 = vmatpush.msra.mxu0 %v59
    %79 = vmatpush.msra.mxu0 %v58
    %80 = vmatpush.msra.mxu0 %v57
    %81 = vmatpush.msra.mxu0 %v56
    %82 = vmatpush.msra.mxu0 %v55
    %83 = vmatmul.f32.gmra.mxu0 %v65
    %v84 = vpop.f32.mrf.mxu0
    %v85 = vadd.f32 0.0, %v84
    %86 = vdwg.mxu0
    %87 = vst [vmem:[#allocation5] sm:$0xff] %v85
    // Predicated region
    $region14: #{tpu_custom_call.1} parent=1 // pred_check
      _
    $region15: #{tpu_custom_call.1} parent=1 // pred_check_branch
      %89 = sbr.rel (0) target = $region17
    $region16: #{tpu_custom_call.1} parent=1 // pred_region
      %91 = vsyncadd [#allocation4], 0
      %s93 = sshll.u32 [#allocation5], 4
      %s94 = int_to_ptr.vmem [resolvable:$true] %s93
      %s95 = sshll.u32 %s2, 4
      %s96 = int_to_ptr.hbm [resolvable:$true] %s95
      %98 = dma.vmem_to_hbm [thread:$0]  %s94, 128, %s96, [#allocation4]
    $region17: #{tpu_custom_call.1} parent=1 // pred_fallthru
      _
    // Predicated region
    $region18: #{tpu_custom_call.1} parent=1 // pred_check
      _
    $region19: #{tpu_custom_call.1} parent=1 // pred_check_branch
      %100 = sbr.rel (0) target = $region21
    $region20: #{tpu_custom_call.1} parent=1 // pred_region
      %102 = dma.done [#allocation4], 128
    $region21: #{tpu_custom_call.1} parent=1 // pred_fallthru
      _
    %103 = vsyncpa [#allocation3], 1
    %104 = vsyncpa [#allocation4], 1

</llo_original>
